<compile_context>
chip_gen: v7x
topology: tpu7x:2x2x1
jax: 0.10.0
libtpu: 0.0.40
codegen_flags: <defaults>
</compile_context>

<pallas_src>
import functools

import jax
import jax.numpy as jnp
from jax.experimental import pallas as pl
from jax.experimental.pallas import tpu as pltpu

KERNEL = 10
PAD = 10
MIN_VALUE = 1.0
MAX_VALUE = 631.0


def _sliding_window_max(x, k, axis):
    """Max over a length-k sliding window along `axis` (valid windows only).

    Uses log-doubling: build running maxes over power-of-two windows, then
    combine two overlapping size-p windows to cover size k.  4 `maximum`
    ops for k=10 instead of 9.
    """
    length = x.shape[axis]
    out_len = length - k + 1

    def sl(arr, start, size):
        idx = [slice(None)] * arr.ndim
        idx[axis] = slice(start, start + size)
        return arr[tuple(idx)]

    if k == 1:
        return sl(x, 0, out_len)

    p = 1
    w = x  # running max over a window of size p
    while 2 * p <= k:
        new_len = length - 2 * p + 1
        w = jnp.maximum(sl(w, 0, new_len), sl(w, p, new_len))
        p *= 2
    if p == k:
        return sl(w, 0, out_len)
    # Overlapping size-p windows at offsets 0 and k-p cover the size-k window.
    return jnp.maximum(sl(w, 0, out_len), sl(w, k - p, out_len))


def _maxpool_clamp_kernel(x_ref, o_ref, xp_ref, *, k, pad, min_v, max_v):
    # x_ref:  (B, h,  w)   unpadded input planes
    # o_ref:  (B, ho, wo)  pooled + clamped output
    # xp_ref: (B, hp, wp)  VMEM scratch holding the -inf padded planes
    _, h, w = x_ref.shape

    # In-kernel -inf padding: fill the scratch, then copy the valid interior.
    xp_ref[...] = jnp.full(xp_ref.shape, -jnp.inf, dtype=xp_ref.dtype)
    xp_ref[:, pad:pad + h, pad:pad + w] = x_ref[...]
    xp = xp_ref[...]

    # Separable sliding-window max: sublane (H) axis first on the full-width
    # tile, then the lane (W) axis on the already-reduced (ho-row) result.
    t = _sliding_window_max(xp, k, axis=1)  # (B, ho, wp)
    t = _sliding_window_max(t, k, axis=2)   # (B, ho, wo)

    # clamp_min then clamp_max
    t = jnp.minimum(jnp.maximum(t, min_v), max_v)
    o_ref[...] = t.astype(o_ref.dtype)


def maxpool_clamp(x, *, kernel=KERNEL, pad=PAD, min_v=MIN_VALUE, max_v=MAX_VALUE):
    """x: (N, C, H, W) float -> (N, C, Ho, Wo) float."""
    n, c, h, w = x.shape
    nc = n * c
    hp, wp = h + 2 * pad, w + 2 * pad
    ho, wo = hp - kernel + 1, wp - kernel + 1

    x_flat = x.reshape(nc, h, w)

    # Plane batching: amortize per-grid-step overhead, but keep the VMEM
    # footprint (double-buffered in/out + scratch) modest on every TPU
    # generation and keep >= 2 grid steps so dual-TensorCore chips still
    # split the work.
    bytes_per_plane = 4 * (2 * h * w + 2 * ho * wo + hp * wp)
    b_budget = max(1, (12 * 1024 * 1024) // bytes_per_plane)
    b_target = max(1, min(b_budget, -(-nc // 2)))  # ceil(nc/2) keeps >=2 steps
    bsz = 1
    for d in range(min(b_target, nc), 0, -1):      # largest divisor of nc
        if nc % d == 0:
            bsz = d
            break

    kernel_fn = functools.partial(
        _maxpool_clamp_kernel, k=kernel, pad=pad, min_v=min_v, max_v=max_v)

    out = pl.pallas_call(
        kernel_fn,
        out_shape=jax.ShapeDtypeStruct((nc, ho, wo), x.dtype),
        grid=(nc // bsz,),
        in_specs=[pl.BlockSpec((bsz, h, w), lambda i: (i, 0, 0))],
        out_specs=pl.BlockSpec((bsz, ho, wo), lambda i: (i, 0, 0)),
        scratch_shapes=[pltpu.VMEM((bsz, hp, wp), x.dtype)],
        compiler_params=pltpu.CompilerParams(
            dimension_semantics=("parallel",)),
    )(x_flat)

    return out.reshape(n, c, ho, wo)


def _reference(x, *, kernel=KERNEL, pad=PAD, min_v=MIN_VALUE, max_v=MAX_VALUE):
    # Pure-JAX reference using reduce_window.
    y = jax.lax.reduce_window(
        x, -jnp.inf, jax.lax.max,
        window_dimensions=(1, 1, kernel, kernel),
        window_strides=(1, 1, 1, 1),
        padding=((0, 0), (0, 0), (pad, pad), (pad, pad)))
    return jnp.minimum(jnp.maximum(y, min_v), max_v)


if __name__ == "__main__":
    key = jax.random.PRNGKey(0)
    # Small shape consistent with the module's (N, 3, H, W) float input; the
    # scale exercises both clamp_min(1) and clamp_max(631).
    x = 300.0 * jax.random.normal(key, (2, 3, 16, 24), dtype=jnp.float32)

    out = jax.block_until_ready(maxpool_clamp(x))
    ref = jax.block_until_ready(_reference(x))

    assert out.shape == ref.shape, (out.shape, ref.shape)
    assert jnp.allclose(out, ref), "mismatch vs reference"

    print("KERNEL_OK")
</pallas_src>

<mosaic_0001>
module attributes {stable_mosaic.version = 11 : i64} {
  func.func @_maxpool_clamp_kernel(%arg0: i32, %arg1: memref<3x16x24xf32, #tpu.memory_space<vmem>>, %arg2: memref<3x27x35xf32, #tpu.memory_space<vmem>>, %arg3: memref<3x36x44xf32, #tpu.memory_space<vmem>>) attributes {dimension_semantics = [#tpu.dimension_semantics<parallel>], iteration_bounds = array<i64: 2>, scalar_prefetch = 0 : i64, scratch_operands = 1 : i64, tpu.core_type = #tpu.core_type<tc>, window_params = [{transform_indices = @transform_0, window_bounds = array<i64: 3, 16, 24>}, {transform_indices = @transform_1, window_bounds = array<i64: 3, 27, 35>}]} {
    %cst = arith.constant 0xFF800000 : f32
    %0 = vector.broadcast %cst : f32 to vector<3x36x44xf32>
    %c0 = arith.constant 0 : index
    %c0_0 = arith.constant 0 : index
    %c0_1 = arith.constant 0 : index
    %1 = vector.load %arg3[%c0, %c0_0, %c0_1] : memref<3x36x44xf32, #tpu.memory_space<vmem>>, vector<3x36x44xf32>
    tpu.vector_store %arg3[%c0, %c0_0, %c0_1], %0 {strides = array<i32>} : memref<3x36x44xf32, #tpu.memory_space<vmem>>, vector<3x36x44xf32>,
    %c0_2 = arith.constant 0 : index
    %c0_3 = arith.constant 0 : index
    %c0_4 = arith.constant 0 : index
    %2 = vector.load %arg1[%c0_2, %c0_3, %c0_4] : memref<3x16x24xf32, #tpu.memory_space<vmem>>, vector<3x16x24xf32>
    %c0_5 = arith.constant 0 : index
    %c10 = arith.constant 10 : index
    %c10_6 = arith.constant 10 : index
    %3 = vector.load %arg3[%c0_5, %c10, %c10_6] : memref<3x36x44xf32, #tpu.memory_space<vmem>>, vector<3x16x24xf32>
    tpu.vector_store %arg3[%c0_5, %c10, %c10_6], %2 {strides = array<i32>} : memref<3x36x44xf32, #tpu.memory_space<vmem>>, vector<3x16x24xf32>,
    %c0_7 = arith.constant 0 : index
    %c0_8 = arith.constant 0 : index
    %c0_9 = arith.constant 0 : index
    %4 = vector.load %arg3[%c0_7, %c0_8, %c0_9] : memref<3x36x44xf32, #tpu.memory_space<vmem>>, vector<3x36x44xf32>
    %5 = vector.extract_strided_slice %4 {offsets = [0, 0, 0], sizes = [3, 35, 44], strides = [1, 1, 1]} : vector<3x36x44xf32> to vector<3x35x44xf32>
    %6 = vector.extract_strided_slice %4 {offsets = [0, 1, 0], sizes = [3, 35, 44], strides = [1, 1, 1]} : vector<3x36x44xf32> to vector<3x35x44xf32>
    %7 = arith.maximumf %5, %6 : vector<3x35x44xf32>
    %8 = vector.extract_strided_slice %7 {offsets = [0, 0, 0], sizes = [3, 33, 44], strides = [1, 1, 1]} : vector<3x35x44xf32> to vector<3x33x44xf32>
    %9 = vector.extract_strided_slice %7 {offsets = [0, 2, 0], sizes = [3, 33, 44], strides = [1, 1, 1]} : vector<3x35x44xf32> to vector<3x33x44xf32>
    %10 = arith.maximumf %8, %9 : vector<3x33x44xf32>
    %11 = vector.extract_strided_slice %10 {offsets = [0, 0, 0], sizes = [3, 29, 44], strides = [1, 1, 1]} : vector<3x33x44xf32> to vector<3x29x44xf32>
    %12 = vector.extract_strided_slice %10 {offsets = [0, 4, 0], sizes = [3, 29, 44], strides = [1, 1, 1]} : vector<3x33x44xf32> to vector<3x29x44xf32>
    %13 = arith.maximumf %11, %12 : vector<3x29x44xf32>
    %14 = vector.extract_strided_slice %13 {offsets = [0, 0, 0], sizes = [3, 27, 44], strides = [1, 1, 1]} : vector<3x29x44xf32> to vector<3x27x44xf32>
    %15 = vector.extract_strided_slice %13 {offsets = [0, 2, 0], sizes = [3, 27, 44], strides = [1, 1, 1]} : vector<3x29x44xf32> to vector<3x27x44xf32>
    %16 = arith.maximumf %14, %15 : vector<3x27x44xf32>
    %17 = vector.extract_strided_slice %16 {offsets = [0, 0, 0], sizes = [3, 27, 43], strides = [1, 1, 1]} : vector<3x27x44xf32> to vector<3x27x43xf32>
    %18 = vector.extract_strided_slice %16 {offsets = [0, 0, 1], sizes = [3, 27, 43], strides = [1, 1, 1]} : vector<3x27x44xf32> to vector<3x27x43xf32>
    %19 = arith.maximumf %17, %18 : vector<3x27x43xf32>
    %20 = vector.extract_strided_slice %19 {offsets = [0, 0, 0], sizes = [3, 27, 41], strides = [1, 1, 1]} : vector<3x27x43xf32> to vector<3x27x41xf32>
    %21 = vector.extract_strided_slice %19 {offsets = [0, 0, 2], sizes = [3, 27, 41], strides = [1, 1, 1]} : vector<3x27x43xf32> to vector<3x27x41xf32>
    %22 = arith.maximumf %20, %21 : vector<3x27x41xf32>
    %23 = vector.extract_strided_slice %22 {offsets = [0, 0, 0], sizes = [3, 27, 37], strides = [1, 1, 1]} : vector<3x27x41xf32> to vector<3x27x37xf32>
    %24 = vector.extract_strided_slice %22 {offsets = [0, 0, 4], sizes = [3, 27, 37], strides = [1, 1, 1]} : vector<3x27x41xf32> to vector<3x27x37xf32>
    %25 = arith.maximumf %23, %24 : vector<3x27x37xf32>
    %26 = vector.extract_strided_slice %25 {offsets = [0, 0, 0], sizes = [3, 27, 35], strides = [1, 1, 1]} : vector<3x27x37xf32> to vector<3x27x35xf32>
    %27 = vector.extract_strided_slice %25 {offsets = [0, 0, 2], sizes = [3, 27, 35], strides = [1, 1, 1]} : vector<3x27x37xf32> to vector<3x27x35xf32>
    %28 = arith.maximumf %26, %27 : vector<3x27x35xf32>
    %cst_10 = arith.constant 1.000000e+00 : f32
    %29 = vector.broadcast %cst_10 : f32 to vector<3x27x35xf32>
    %30 = arith.maximumf %28, %29 : vector<3x27x35xf32>
    %cst_11 = arith.constant 6.310000e+02 : f32
    %31 = vector.broadcast %cst_11 : f32 to vector<3x27x35xf32>
    %32 = arith.minimumf %30, %31 : vector<3x27x35xf32>
    %c0_12 = arith.constant 0 : index
    %c0_13 = arith.constant 0 : index
    %c0_14 = arith.constant 0 : index
    %33 = vector.load %arg2[%c0_12, %c0_13, %c0_14] : memref<3x27x35xf32, #tpu.memory_space<vmem>>, vector<3x27x35xf32>
    tpu.vector_store %arg2[%c0_12, %c0_13, %c0_14], %32 {strides = array<i32>} : memref<3x27x35xf32, #tpu.memory_space<vmem>>, vector<3x27x35xf32>,
    return
  }
  func.func @transform_0(%arg0: i32) -> (i32, i32, i32) {
    %c0_i32 = arith.constant 0 : i32
    %c0_i32_0 = arith.constant 0 : i32
    %c0_i32_1 = arith.constant 0 : i32
    return %arg0, %c0_i32, %c0_i32_0 : i32, i32, i32
  }
  func.func @transform_1(%arg0: i32) -> (i32, i32, i32) {
    %c0_i32 = arith.constant 0 : i32
    %c0_i32_0 = arith.constant 0 : i32
    %c0_i32_1 = arith.constant 0 : i32
    return %arg0, %c0_i32, %c0_i32_0 : i32, i32, i32
  }
}

</mosaic_0001>

<llo_original>
// kernel: tpu_custom_call.1
$region0: #{tpu_custom_call.1}
  #allocation0 [shape = 'u32[]', space=smem, size = 0x4, offset = 0x4, fixed_abs, tag = 'smem constant byte address 0x4 - core index']
  #allocation1 [shape = 'u32[144,128]{1,0:T(1,128)}', space=vmem, size = 0x12000, scoped, tag = 'internal scratch']
  #allocation2 [shape = 'f32[3,36,44]{2,1,0:T(8,128)}', space=vmem, size = 0xf000, scoped, tag = 'scratch operand']
  %s0 = inlined_call_operand.hbm [shape: f32[6,16,24], index: 0, kind: input, shape index: {}]
  %s1 = inlined_call_operand.hbm [shape: f32[6,27,35], index: 1, kind: output, shape index: {}]
  %s2 = sld [smem:[#allocation0]]
  $region41: #{tpu_custom_call.1} parent=0
    _
  %s4 = ssub.s32 1, %s2
  %s5 = scalar_select 0, %s4, %s2
  $region1: #{tpu_custom_call.1} parent=0
    #allocation3 [shape = 'u8[49152]{0}', space=vmem, size = 0xc000, scoped, tag = 'input window, operand 0']
    #allocation4 [shape = 's32[2]{0}', space=sflag, size = 0x8, scoped, tag = 'scoped memory for tpu_custom_call.1']
    #allocation5 [shape = 's32[2]{0}', space=sflag, size = 0x8, scoped, tag = 'scoped memory for tpu_custom_call.1']
    #allocation6 [shape = 'u8[98304]{0}', space=vmem, size = 0x18000, scoped, tag = 'output window, operand 0']
    %6 = vsyncpa [#allocation4], 0
    %s7 = scalar_lea.sflag [#allocation4], 1
    %8 = vsyncpa %s7, 0
    %9 = vsyncpa [#allocation5], 0
    %s10 = scalar_lea.sflag [#allocation5], 1
    %11 = vsyncpa %s10, 0
    loop: start=0, step=1, limit=4
    $region2: #{tpu_custom_call.1} parent=1 // loop_pre_header
      _
    $region3: #{tpu_custom_call.1} parent=1 // loop_header
      %s13 = sphi 0, %s17
      %p14 = scmp.ge.s32.totalorder %s13, 4
      %s23 = sphi 0, %s25
      %s26 = sphi 0, %s23
      %s27 = sphi 0, %s26
      %s43 = sphi 0, %s27
      %s49 = sphi 0, %s51
      %s52 = sphi 0, %s49
      %s53 = sphi 0, %s52
      %s69 = sphi 0, %s53
    $region4: #{tpu_custom_call.1} parent=1 // loop_header_branch
      %16 = sbr.rel (%p14) target = $region8
    $region5: #{tpu_custom_call.1} parent=1 // loop_body
      %s18 = ssub.s32 %s13, 1
      %s19 = ssub.s32 %s13, 2
      %s20 = sadd.s32 %s13, 1
      %s21 = ssub.s32 %s13, %s20
      %p22 = scmp.eq.s32.totalorder %s21, 0
      %s24 = sadd.s32 %s23, 1
      %s25 = scalar_select %p22, %s23, %s24
      %p28 = pneg %p22
      %p29 = scmp.eq.s32.totalorder %s13, 1
      %p30 = por %p28, %p29
      %p31 = scmp.ne.s32.totalorder %s23, %s26
      %p32 = scmp.eq.s32.totalorder %s13, 0
      %p33 = por %p31, %p32
      %p34 = scmp.ne.s32.totalorder %s23, %s26
      %p35 = scmp.eq.s32.totalorder %s18, 1
      %p36 = por %p34, %p35
      %p37 = scmp.ne.s32.totalorder %s26, %s27
      %p38 = scmp.eq.s32.totalorder %s18, 0
      %p39 = por %p37, %p38
      %p40 = scmp.ne.s32.totalorder %s26, %s27
      %p41 = scmp.eq.s32.totalorder %s19, 1
      %p42 = por %p40, %p41
      %p44 = scmp.ne.s32.totalorder %s27, %s43
      %p45 = scmp.eq.s32.totalorder %s19, 0
      %p46 = por %p44, %p45
      %s47 = ssub.s32 %s13, %s20
      %p48 = scmp.eq.s32.totalorder %s47, 0
      %s50 = sadd.s32 %s49, 1
      %s51 = scalar_select %p48, %s49, %s50
      %p54 = pneg %p48
      %p55 = scmp.eq.s32.totalorder %s13, 1
      %p56 = por %p54, %p55
      %p57 = scmp.ne.s32.totalorder %s49, %s52
      %p58 = scmp.eq.s32.totalorder %s13, 0
      %p59 = por %p57, %p58
      %p60 = scmp.ne.s32.totalorder %s49, %s52
      %p61 = scmp.eq.s32.totalorder %s18, 1
      %p62 = por %p60, %p61
      %p63 = scmp.ne.s32.totalorder %s52, %s53
      %p64 = scmp.eq.s32.totalorder %s18, 0
      %p65 = por %p63, %p64
      %p66 = scmp.ne.s32.totalorder %s52, %s53
      %p67 = scmp.eq.s32.totalorder %s19, 1
      %p68 = por %p66, %p67
      %p70 = scmp.ne.s32.totalorder %s53, %s69
      %p71 = scmp.eq.s32.totalorder %s19, 0
      %p72 = por %p70, %p71
      %p73 = scmp.le.s32.totalorder 1, %s13
      %p74 = scmp.lt.s32.totalorder %s13, 3
      %p75 = pnand %p73, %p74
      %p76 = pneg %p75
      // Predicated region
      $region9: #{tpu_custom_call.1} parent=5 // pred_check
        _
      $region10: #{tpu_custom_call.1} parent=5 // pred_check_branch
        %78 = sbr.rel (%p75) target = $region12
      $region11: #{tpu_custom_call.1} parent=5 // pred_region
        %s79 = ssub.s32 %s13, 1
      $region12: #{tpu_custom_call.1} parent=5 // pred_fallthru
        _
      %p80 = scmp.lt.s32.totalorder %s13, 2
      // Predicated region
      $region13: #{tpu_custom_call.1} parent=5 // pred_check
        %p81 = pneg %p80
      $region14: #{tpu_custom_call.1} parent=5 // pred_check_branch
        %83 = sbr.rel (%p81) target = $region16
      $region15: #{tpu_custom_call.1} parent=5 // pred_region
        // Predicated region
        $region17: #{tpu_custom_call.1} parent=15 // pred_check
          %p84 = pneg %p33
        $region18: #{tpu_custom_call.1} parent=15 // pred_check_branch
          %86 = sbr.rel (%p84) target = $region20
        $region19: #{tpu_custom_call.1} parent=15 // pred_region
          %s87 = sand.u32 %s23, 1
          %s88 = scalar_lea.sflag [#allocation4], %s87
          %s89 = sand.u32 %s23, 1
          %s90 = smul.addr %s89, 48
          %s91 = scalar_lea.vmem [#allocation3], %s90
          %s92 = smul.u32 3, %s13
          %s94 = ssub.s32 768, 768
          %95 = vsyncadd %s88, %s94
          %s96 = smul.addr %s92, 2
          %s97 = smul.addr %s96, 128
          %s98 = scalar_lea.hbm %s0, %s97
          %s99 = sshll.u32 %s91, 4
          %s100 = int_to_ptr.vmem [resolvable:$true] %s99
          %105 = dma.hbm_to_vmem [thread:$0]  %s98, 768, %s100, %s88, 128, 128, 8
        $region20: #{tpu_custom_call.1} parent=15 // pred_fallthru
          _
      $region16: #{tpu_custom_call.1} parent=5 // pred_fallthru
        _
      %p106 = scmp.le.s32.totalorder 1, %s13
      %p107 = scmp.lt.s32.totalorder %s13, 3
      %p108 = pnand %p106, %p107
      %p109 = pneg %p108
      // Predicated region
      $region21: #{tpu_custom_call.1} parent=5 // pred_check
        _
      $region22: #{tpu_custom_call.1} parent=5 // pred_check_branch
        %111 = sbr.rel (%p108) target = $region24
      $region23: #{tpu_custom_call.1} parent=5 // pred_region
        %s112 = ssub.s32 %s13, 1
        %s113 = sand.u32 %s26, 1
        %s114 = scalar_lea.sflag [#allocation4], %s113
        %s115 = sand.u32 %s26, 1
        %s116 = smul.addr %s115, 48
        %s117 = scalar_lea.vmem [#allocation3], %s116
        // Predicated region
        $region25: #{tpu_custom_call.1} parent=23 // pred_check
          %p118 = pneg %p39
        $region26: #{tpu_custom_call.1} parent=23 // pred_check_branch
          %120 = sbr.rel (%p118) target = $region28
        $region27: #{tpu_custom_call.1} parent=23 // pred_region
          %121 = dma.done %s114, 768
        $region28: #{tpu_custom_call.1} parent=23 // pred_fallthru
          _
        %s122 = sand.u32 %s26, 1
        %s123 = scalar_lea.sflag [#allocation4], %s122
        %s124 = sand.u32 %s26, 1
        %s125 = smul.addr %s124, 48
        %s126 = scalar_lea.vmem [#allocation3], %s125
        %p127 = pneg %p39
        %p128 = pneg %p36
        %p129 = pneg %p65
        %p130 = pneg %p62
        %s131 = sand.u32 %s52, 1
        %s132 = scalar_lea.sflag [#allocation5], %s131
        %s133 = sand.u32 %s52, 1
        %s134 = smul.addr %s133, 96
        %s135 = scalar_lea.vmem [#allocation6], %s134
        %s136 = smul.u32 3, %s18
        %s137 = smul.u32 3, %s18
        %vm138 = vcmask 359424
        %139 = vst.msk [vmem:[#allocation2] sm:$0xff] %vm138, -inf
        %140 = vst.msk [vmem:[#allocation2 + $0x8] sm:$0xff] %vm138, -inf
        %141 = vst.msk [vmem:[#allocation2 + $0x10] sm:$0xff] %vm138, -inf
        %142 = vst.msk [vmem:[#allocation2 + $0x18] sm:$0xff] %vm138, -inf
        %vm143 = vcmask 355328
        %144 = vst.msk [vmem:[#allocation2 + $0x20] sm:$0xf] %vm143, -inf
        %145 = vst.msk [vmem:[#allocation2 + $0x28] sm:$0xff] %vm138, -inf
        %146 = vst.msk [vmem:[#allocation2 + $0x30] sm:$0xff] %vm138, -inf
        %147 = vst.msk [vmem:[#allocation2 + $0x38] sm:$0xff] %vm138, -inf
        %148 = vst.msk [vmem:[#allocation2 + $0x40] sm:$0xff] %vm138, -inf
        %149 = vst.msk [vmem:[#allocation2 + $0x48] sm:$0xf] %vm143, -inf
        %150 = vst.msk [vmem:[#allocation2 + $0x50] sm:$0xff] %vm138, -inf
        %151 = vst.msk [vmem:[#allocation2 + $0x58] sm:$0xff] %vm138, -inf
        %152 = vst.msk [vmem:[#allocation2 + $0x60] sm:$0xff] %vm138, -inf
        %153 = vst.msk [vmem:[#allocation2 + $0x68] sm:$0xff] %vm138, -inf
        %154 = vst.msk [vmem:[#allocation2 + $0x70] sm:$0xf] %vm143, -inf
        %v155 = vld [vmem:[%s117] sm:$0xff]
        %v156 = vld [vmem:[%s117 + $0x8] sm:$0xff]
        %v157 = vld [vmem:[%s117 + $0x10] sm:$0xff]
        %v158 = vld [vmem:[%s117 + $0x18] sm:$0xff]
        %v159 = vld [vmem:[%s117 + $0x20] sm:$0xff]
        %v160 = vld [vmem:[%s117 + $0x28] sm:$0xff]
        %167 = vrot.lane.b32.xlu0 %v155, 10
        %v168 = vpop.permute.xlu0 %167
        %169 = vrot.lane.b32.xlu0 %v156, 10
        %v170 = vpop.permute.xlu0 %169
        %171 = vrot.lane.b32.xlu0 %v157, 10
        %v172 = vpop.permute.xlu0 %171
        %173 = vrot.lane.b32.xlu0 %v158, 10
        %v174 = vpop.permute.xlu0 %173
        %175 = vrot.lane.b32.xlu0 %v159, 10
        %v176 = vpop.permute.xlu0 %175
        %177 = vrot.lane.b32.xlu0 %v160, 10
        %v178 = vpop.permute.xlu0 %177
        %vm185 = vcmask 277584
        %186 = vst.msk [vmem:[#allocation2 + $0xa] sm:$0xff] %vm185, %v168
        %187 = vst.msk [vmem:[#allocation2 + $0x12] sm:$0xff] %vm185, %v170
        %188 = vst.msk [vmem:[#allocation2 + $0x32] sm:$0xff] %vm185, %v172
        %189 = vst.msk [vmem:[#allocation2 + $0x3a] sm:$0xff] %vm185, %v174
        %190 = vst.msk [vmem:[#allocation2 + $0x5a] sm:$0xff] %vm185, %v176
        %191 = vst.msk [vmem:[#allocation2 + $0x62] sm:$0xff] %vm185, %v178
        %v192 = vld [vmem:[#allocation2] sm:$0xff]
        %v193 = vld [vmem:[#allocation2 + $0x8] sm:$0xff]
        %v194 = vld [vmem:[#allocation2 + $0x10] sm:$0xff]
        %v195 = vld [vmem:[#allocation2 + $0x18] sm:$0xff]
        %v196 = vld [vmem:[#allocation2 + $0x20] sm:$0xf]
        %v197 = vld [vmem:[#allocation2 + $0x28] sm:$0xff]
        %v198 = vld [vmem:[#allocation2 + $0x30] sm:$0xff]
        %v199 = vld [vmem:[#allocation2 + $0x38] sm:$0xff]
        %v200 = vld [vmem:[#allocation2 + $0x40] sm:$0xff]
        %v201 = vld [vmem:[#allocation2 + $0x48] sm:$0xf]
        %v202 = vld [vmem:[#allocation2 + $0x50] sm:$0xff]
        %v203 = vld [vmem:[#allocation2 + $0x58] sm:$0xff]
        %v204 = vld [vmem:[#allocation2 + $0x60] sm:$0xff]
        %v205 = vld [vmem:[#allocation2 + $0x68] sm:$0xff]
        %v206 = vld [vmem:[#allocation2 + $0x70] sm:$0xf]
        %vm222 = vcmask 1046528
        %v223 = vrot.slane %v192, 1
        %v224 = vrot.slane %v193, 1
        %v225 = vsel %vm222, %v223, %v224
        %v226 = vrot.slane %v194, 1
        %v227 = vsel %vm222, %v224, %v226
        %v228 = vrot.slane %v195, 1
        %v229 = vsel %vm222, %v226, %v228
        %v230 = vrot.slane %v196, 1
        %v231 = vsel %vm222, %v228, %v230
        %v232 = vrot.slane %v197, 1
        %v233 = vrot.slane %v198, 1
        %v234 = vsel %vm222, %v232, %v233
        %v235 = vrot.slane %v199, 1
        %v236 = vsel %vm222, %v233, %v235
        %v237 = vrot.slane %v200, 1
        %v238 = vsel %vm222, %v235, %v237
        %v239 = vrot.slane %v201, 1
        %v240 = vsel %vm222, %v237, %v239
        %v241 = vrot.slane %v202, 1
        %v242 = vrot.slane %v203, 1
        %v243 = vsel %vm222, %v241, %v242
        %v244 = vrot.slane %v204, 1
        %v245 = vsel %vm222, %v242, %v244
        %v246 = vrot.slane %v205, 1
        %v247 = vsel %vm222, %v244, %v246
        %v248 = vrot.slane %v206, 1
        %v249 = vsel %vm222, %v246, %v248
        %v265 = vmax.f32 %v192, %v225
        %v266 = vmax.f32 %v193, %v227
        %v267 = vmax.f32 %v194, %v229
        %v268 = vmax.f32 %v195, %v231
        %v269 = vmax.f32 %v196, %v230
        %v270 = vmax.f32 %v197, %v234
        %v271 = vmax.f32 %v198, %v236
        %v272 = vmax.f32 %v199, %v238
        %v273 = vmax.f32 %v200, %v240
        %v274 = vmax.f32 %v201, %v239
        %v275 = vmax.f32 %v202, %v243
        %v276 = vmax.f32 %v203, %v245
        %v277 = vmax.f32 %v204, %v247
        %v278 = vmax.f32 %v205, %v249
        %v279 = vmax.f32 %v206, %v248
        %vm295 = vcmask 1045504
        %v296 = vrot.slane %v265, 2
        %v297 = vrot.slane %v266, 2
        %v298 = vsel %vm295, %v296, %v297
        %v299 = vrot.slane %v267, 2
        %v300 = vsel %vm295, %v297, %v299
        %v301 = vrot.slane %v268, 2
        %v302 = vsel %vm295, %v299, %v301
        %v303 = vrot.slane %v269, 2
        %v304 = vsel %vm295, %v301, %v303
        %v305 = vrot.slane %v270, 2
        %v306 = vrot.slane %v271, 2
        %v307 = vsel %vm295, %v305, %v306
        %v308 = vrot.slane %v272, 2
        %v309 = vsel %vm295, %v306, %v308
        %v310 = vrot.slane %v273, 2
        %v311 = vsel %vm295, %v308, %v310
        %v312 = vrot.slane %v274, 2
        %v313 = vsel %vm295, %v310, %v312
        %v314 = vrot.slane %v275, 2
        %v315 = vrot.slane %v276, 2
        %v316 = vsel %vm295, %v314, %v315
        %v317 = vrot.slane %v277, 2
        %v318 = vsel %vm295, %v315, %v317
        %v319 = vrot.slane %v278, 2
        %v320 = vsel %vm295, %v317, %v319
        %v321 = vrot.slane %v279, 2
        %v322 = vsel %vm295, %v319, %v321
        %v338 = vmax.f32 %v265, %v298
        %v339 = vmax.f32 %v266, %v300
        %v340 = vmax.f32 %v267, %v302
        %v341 = vmax.f32 %v268, %v304
        %v342 = vmax.f32 %v269, %v303
        %v343 = vmax.f32 %v270, %v307
        %v344 = vmax.f32 %v271, %v309
        %v345 = vmax.f32 %v272, %v311
        %v346 = vmax.f32 %v273, %v313
        %v347 = vmax.f32 %v274, %v312
        %v348 = vmax.f32 %v275, %v316
        %v349 = vmax.f32 %v276, %v318
        %v350 = vmax.f32 %v277, %v320
        %v351 = vmax.f32 %v278, %v322
        %v352 = vmax.f32 %v279, %v321
        %vm368 = vcmask 1043456
        %v369 = vrot.slane %v338, 4
        %v370 = vrot.slane %v339, 4
        %v371 = vsel %vm368, %v369, %v370
        %v372 = vrot.slane %v340, 4
        %v373 = vsel %vm368, %v370, %v372
        %v374 = vrot.slane %v341, 4
        %v375 = vsel %vm368, %v372, %v374
        %v376 = vrot.slane %v342, 4
        %v377 = vsel %vm368, %v374, %v376
        %v378 = vrot.slane %v343, 4
        %v379 = vrot.slane %v344, 4
        %v380 = vsel %vm368, %v378, %v379
        %v381 = vrot.slane %v345, 4
        %v382 = vsel %vm368, %v379, %v381
        %v383 = vrot.slane %v346, 4
        %v384 = vsel %vm368, %v381, %v383
        %v385 = vrot.slane %v347, 4
        %v386 = vsel %vm368, %v383, %v385
        %v387 = vrot.slane %v348, 4
        %v388 = vrot.slane %v349, 4
        %v389 = vsel %vm368, %v387, %v388
        %v390 = vrot.slane %v350, 4
        %v391 = vsel %vm368, %v388, %v390
        %v392 = vrot.slane %v351, 4
        %v393 = vsel %vm368, %v390, %v392
        %v394 = vrot.slane %v352, 4
        %v395 = vsel %vm368, %v392, %v394
        %v408 = vmax.f32 %v338, %v371
        %v409 = vmax.f32 %v339, %v373
        %v410 = vmax.f32 %v340, %v375
        %v411 = vmax.f32 %v341, %v377
        %v412 = vmax.f32 %v343, %v380
        %v413 = vmax.f32 %v344, %v382
        %v414 = vmax.f32 %v345, %v384
        %v415 = vmax.f32 %v346, %v386
        %v416 = vmax.f32 %v348, %v389
        %v417 = vmax.f32 %v349, %v391
        %v418 = vmax.f32 %v350, %v393
        %v419 = vmax.f32 %v351, %v395
        %v432 = vrot.slane %v408, 2
        %v433 = vrot.slane %v409, 2
        %v434 = vsel %vm295, %v432, %v433
        %v435 = vrot.slane %v410, 2
        %v436 = vsel %vm295, %v433, %v435
        %v437 = vrot.slane %v411, 2
        %v438 = vsel %vm295, %v435, %v437
        %v439 = vrot.slane %v412, 2
        %v440 = vrot.slane %v413, 2
        %v441 = vsel %vm295, %v439, %v440
        %v442 = vrot.slane %v414, 2
        %v443 = vsel %vm295, %v440, %v442
        %v444 = vrot.slane %v415, 2
        %v445 = vsel %vm295, %v442, %v444
        %v446 = vrot.slane %v416, 2
        %v447 = vrot.slane %v417, 2
        %v448 = vsel %vm295, %v446, %v447
        %v449 = vrot.slane %v418, 2
        %v450 = vsel %vm295, %v447, %v449
        %v451 = vrot.slane %v419, 2
        %v452 = vsel %vm295, %v449, %v451
        %v465 = vmax.f32 %v408, %v434
        %v466 = vmax.f32 %v409, %v436
        %v467 = vmax.f32 %v410, %v438
        %v468 = vmax.f32 %v411, %v437
        %v469 = vmax.f32 %v412, %v441
        %v470 = vmax.f32 %v413, %v443
        %v471 = vmax.f32 %v414, %v445
        %v472 = vmax.f32 %v415, %v444
        %v473 = vmax.f32 %v416, %v448
        %v474 = vmax.f32 %v417, %v450
        %v475 = vmax.f32 %v418, %v452
        %v476 = vmax.f32 %v419, %v451
        %489 = vrot.lane.b32.xlu0 %v465, 127
        %v490 = vpop.permute.xlu0 %489
        %491 = vrot.lane.b32.xlu0 %v466, 127
        %v492 = vpop.permute.xlu0 %491
        %493 = vrot.lane.b32.xlu0 %v467, 127
        %v494 = vpop.permute.xlu0 %493
        %495 = vrot.lane.b32.xlu0 %v468, 127
        %v496 = vpop.permute.xlu0 %495
        %497 = vrot.lane.b32.xlu0 %v469, 127
        %v498 = vpop.permute.xlu0 %497
        %499 = vrot.lane.b32.xlu0 %v470, 127
        %v500 = vpop.permute.xlu0 %499
        %501 = vrot.lane.b32.xlu0 %v471, 127
        %v502 = vpop.permute.xlu0 %501
        %503 = vrot.lane.b32.xlu0 %v472, 127
        %v504 = vpop.permute.xlu0 %503
        %505 = vrot.lane.b32.xlu0 %v473, 127
        %v506 = vpop.permute.xlu0 %505
        %507 = vrot.lane.b32.xlu0 %v474, 127
        %v508 = vpop.permute.xlu0 %507
        %509 = vrot.lane.b32.xlu0 %v475, 127
        %v510 = vpop.permute.xlu0 %509
        %511 = vrot.lane.b32.xlu0 %v476, 127
        %v512 = vpop.permute.xlu0 %511
        %v525 = vmax.f32 %v465, %v490
        %v526 = vmax.f32 %v466, %v492
        %v527 = vmax.f32 %v467, %v494
        %v528 = vmax.f32 %v468, %v496
        %v529 = vmax.f32 %v469, %v498
        %v530 = vmax.f32 %v470, %v500
        %v531 = vmax.f32 %v471, %v502
        %v532 = vmax.f32 %v472, %v504
        %v533 = vmax.f32 %v473, %v506
        %v534 = vmax.f32 %v474, %v508
        %v535 = vmax.f32 %v475, %v510
        %v536 = vmax.f32 %v476, %v512
        %549 = vrot.lane.b32.xlu0 %v525, 126
        %v550 = vpop.permute.xlu0 %549
        %551 = vrot.lane.b32.xlu0 %v526, 126
        %v552 = vpop.permute.xlu0 %551
        %553 = vrot.lane.b32.xlu0 %v527, 126
        %v554 = vpop.permute.xlu0 %553
        %555 = vrot.lane.b32.xlu0 %v528, 126
        %v556 = vpop.permute.xlu0 %555
        %557 = vrot.lane.b32.xlu0 %v529, 126
        %v558 = vpop.permute.xlu0 %557
        %559 = vrot.lane.b32.xlu0 %v530, 126
        %v560 = vpop.permute.xlu0 %559
        %561 = vrot.lane.b32.xlu0 %v531, 126
        %v562 = vpop.permute.xlu0 %561
        %563 = vrot.lane.b32.xlu0 %v532, 126
        %v564 = vpop.permute.xlu0 %563
        %565 = vrot.lane.b32.xlu0 %v533, 126
        %v566 = vpop.permute.xlu0 %565
        %567 = vrot.lane.b32.xlu0 %v534, 126
        %v568 = vpop.permute.xlu0 %567
        %569 = vrot.lane.b32.xlu0 %v535, 126
        %v570 = vpop.permute.xlu0 %569
        %571 = vrot.lane.b32.xlu0 %v536, 126
        %v572 = vpop.permute.xlu0 %571
        %v585 = vmax.f32 %v525, %v550
        %v586 = vmax.f32 %v526, %v552
        %v587 = vmax.f32 %v527, %v554
        %v588 = vmax.f32 %v528, %v556
        %v589 = vmax.f32 %v529, %v558
        %v590 = vmax.f32 %v530, %v560
        %v591 = vmax.f32 %v531, %v562
        %v592 = vmax.f32 %v532, %v564
        %v593 = vmax.f32 %v533, %v566
        %v594 = vmax.f32 %v534, %v568
        %v595 = vmax.f32 %v535, %v570
        %v596 = vmax.f32 %v536, %v572
        %609 = vrot.lane.b32.xlu0 %v585, 124
        %v610 = vpop.permute.xlu0 %609
        %611 = vrot.lane.b32.xlu0 %v586, 124
        %v612 = vpop.permute.xlu0 %611
        %613 = vrot.lane.b32.xlu0 %v587, 124
        %v614 = vpop.permute.xlu0 %613
        %615 = vrot.lane.b32.xlu0 %v588, 124
        %v616 = vpop.permute.xlu0 %615
        %617 = vrot.lane.b32.xlu0 %v589, 124
        %v618 = vpop.permute.xlu0 %617
        %619 = vrot.lane.b32.xlu0 %v590, 124
        %v620 = vpop.permute.xlu0 %619
        %621 = vrot.lane.b32.xlu0 %v591, 124
        %v622 = vpop.permute.xlu0 %621
        %623 = vrot.lane.b32.xlu0 %v592, 124
        %v624 = vpop.permute.xlu0 %623
        %625 = vrot.lane.b32.xlu0 %v593, 124
        %v626 = vpop.permute.xlu0 %625
        %627 = vrot.lane.b32.xlu0 %v594, 124
        %v628 = vpop.permute.xlu0 %627
        %629 = vrot.lane.b32.xlu0 %v595, 124
        %v630 = vpop.permute.xlu0 %629
        %631 = vrot.lane.b32.xlu0 %v596, 124
        %v632 = vpop.permute.xlu0 %631
        %v645 = vmax.f32 %v585, %v610
        %v646 = vmax.f32 %v586, %v612
        %v647 = vmax.f32 %v587, %v614
        %v648 = vmax.f32 %v588, %v616
        %v649 = vmax.f32 %v589, %v618
        %v650 = vmax.f32 %v590, %v620
        %v651 = vmax.f32 %v591, %v622
        %v652 = vmax.f32 %v592, %v624
        %v653 = vmax.f32 %v593, %v626
        %v654 = vmax.f32 %v594, %v628
        %v655 = vmax.f32 %v595, %v630
        %v656 = vmax.f32 %v596, %v632
        %669 = vrot.lane.b32.xlu0 %v645, 126
        %v670 = vpop.permute.xlu0 %669
        %671 = vrot.lane.b32.xlu0 %v646, 126
        %v672 = vpop.permute.xlu0 %671
        %673 = vrot.lane.b32.xlu0 %v647, 126
        %v674 = vpop.permute.xlu0 %673
        %675 = vrot.lane.b32.xlu0 %v648, 126
        %v676 = vpop.permute.xlu0 %675
        %677 = vrot.lane.b32.xlu0 %v649, 126
        %v678 = vpop.permute.xlu0 %677
        %679 = vrot.lane.b32.xlu0 %v650, 126
        %v680 = vpop.permute.xlu0 %679
        %681 = vrot.lane.b32.xlu0 %v651, 126
        %v682 = vpop.permute.xlu0 %681
        %683 = vrot.lane.b32.xlu0 %v652, 126
        %v684 = vpop.permute.xlu0 %683
        %685 = vrot.lane.b32.xlu0 %v653, 126
        %v686 = vpop.permute.xlu0 %685
        %687 = vrot.lane.b32.xlu0 %v654, 126
        %v688 = vpop.permute.xlu0 %687
        %689 = vrot.lane.b32.xlu0 %v655, 126
        %v690 = vpop.permute.xlu0 %689
        %691 = vrot.lane.b32.xlu0 %v656, 126
        %v692 = vpop.permute.xlu0 %691
        %v705 = vmax.f32 %v645, %v670
        %v706 = vmax.f32 %v646, %v672
        %v707 = vmax.f32 %v647, %v674
        %v708 = vmax.f32 %v648, %v676
        %v709 = vmax.f32 %v649, %v678
        %v710 = vmax.f32 %v650, %v680
        %v711 = vmax.f32 %v651, %v682
        %v712 = vmax.f32 %v652, %v684
        %v713 = vmax.f32 %v653, %v686
        %v714 = vmax.f32 %v654, %v688
        %v715 = vmax.f32 %v655, %v690
        %v716 = vmax.f32 %v656, %v692
        %v717 = vmax.f32 %v705, 1.0
        %v718 = vmax.f32 %v706, 1.0
        %v719 = vmax.f32 %v707, 1.0
        %v720 = vmax.f32 %v708, 1.0
        %v721 = vmax.f32 %v709, 1.0
        %v722 = vmax.f32 %v710, 1.0
        %v723 = vmax.f32 %v711, 1.0
        %v724 = vmax.f32 %v712, 1.0
        %v725 = vmax.f32 %v713, 1.0
        %v726 = vmax.f32 %v714, 1.0
        %v727 = vmax.f32 %v715, 1.0
        %v728 = vmax.f32 %v716, 1.0
        %v729 = vmin.f32 %v717, 631.0
        %v730 = vmin.f32 %v718, 631.0
        %v731 = vmin.f32 %v719, 631.0
        %v732 = vmin.f32 %v720, 631.0
        %v733 = vmin.f32 %v721, 631.0
        %v734 = vmin.f32 %v722, 631.0
        %v735 = vmin.f32 %v723, 631.0
        %v736 = vmin.f32 %v724, 631.0
        %v737 = vmin.f32 %v725, 631.0
        %v738 = vmin.f32 %v726, 631.0
        %v739 = vmin.f32 %v727, 631.0
        %v740 = vmin.f32 %v728, 631.0
        %vm741 = vcmask 285696
        %742 = vst.msk [vmem:[%s135] sm:$0xff] %vm741, %v729
        %743 = vst.msk [vmem:[%s135 + $0x8] sm:$0xff] %vm741, %v730
        %744 = vst.msk [vmem:[%s135 + $0x10] sm:$0xff] %vm741, %v731
        %vm745 = vcmask 280576
        %746 = vst.msk [vmem:[%s135 + $0x18] sm:$0x7] %vm745, %v732
        %747 = vst.msk [vmem:[%s135 + $0x20] sm:$0xff] %vm741, %v733
        %748 = vst.msk [vmem:[%s135 + $0x28] sm:$0xff] %vm741, %v734
        %749 = vst.msk [vmem:[%s135 + $0x30] sm:$0xff] %vm741, %v735
        %750 = vst.msk [vmem:[%s135 + $0x38] sm:$0x7] %vm745, %v736
        %751 = vst.msk [vmem:[%s135 + $0x40] sm:$0xff] %vm741, %v737
        %752 = vst.msk [vmem:[%s135 + $0x48] sm:$0xff] %vm741, %v738
        %753 = vst.msk [vmem:[%s135 + $0x50] sm:$0xff] %vm741, %v739
        %754 = vst.msk [vmem:[%s135 + $0x58] sm:$0x7] %vm745, %v740
        %s755 = sand.u32 %s52, 1
        %s756 = scalar_lea.sflag [#allocation5], %s755
        %s757 = sand.u32 %s52, 1
        %s758 = smul.addr %s757, 96
        %s759 = scalar_lea.vmem [#allocation6], %s758
        // Predicated region
        $region29: #{tpu_custom_call.1} parent=23 // pred_check
          %p760 = pneg %p62
        $region30: #{tpu_custom_call.1} parent=23 // pred_check_branch
          %762 = sbr.rel (%p760) target = $region32
        $region31: #{tpu_custom_call.1} parent=23 // pred_region
          %s763 = smul.u32 3, %s18
          %s765 = ssub.s32 1536, 1536
          %766 = vsyncadd %s756, %s765
          %s767 = smul.addr %s763, 4
          %s768 = smul.addr %s767, 128
          %s769 = scalar_lea.hbm %s1, %s768
          %s770 = sshll.u32 %s759, 4
          %s771 = int_to_ptr.vmem [resolvable:$true] %s770
          %776 = dma.vmem_to_hbm [thread:$0]  %s771, 1536, %s769, %s756, 128, 128, 8
        $region32: #{tpu_custom_call.1} parent=23 // pred_fallthru
          _
      $region24: #{tpu_custom_call.1} parent=5 // pred_fallthru
        _
      %p777 = scmp.le.s32.totalorder 2, %s13
      // Predicated region
      $region33: #{tpu_custom_call.1} parent=5 // pred_check
        %p778 = pneg %p777
      $region34: #{tpu_custom_call.1} parent=5 // pred_check_branch
        %780 = sbr.rel (%p778) target = $region36
      $region35: #{tpu_custom_call.1} parent=5 // pred_region
        %s781 = ssub.s32 %s13, 2
        // Predicated region
        $region37: #{tpu_custom_call.1} parent=35 // pred_check
          %p782 = pneg %p68
        $region38: #{tpu_custom_call.1} parent=35 // pred_check_branch
          %784 = sbr.rel (%p782) target = $region40
        $region39: #{tpu_custom_call.1} parent=35 // pred_region
          %s785 = sand.u32 %s53, 1
          %s786 = scalar_lea.sflag [#allocation5], %s785
          %s787 = sand.u32 %s53, 1
          %s788 = smul.addr %s787, 96
          %s789 = scalar_lea.vmem [#allocation6], %s788
          %790 = dma.done %s786, 1536
        $region40: #{tpu_custom_call.1} parent=35 // pred_fallthru
          _
      $region36: #{tpu_custom_call.1} parent=5 // pred_fallthru
        _
    $region6: #{tpu_custom_call.1} parent=1 // loop_footer
      %s17 = sadd.s32 1, %s13
    $region7: #{tpu_custom_call.1} parent=1 // loop_footer_branch
      %12 = sbr.rel target = $region3
    $region8: #{tpu_custom_call.1} parent=1 // loop_exit
      _
    %791 = vsyncpa [#allocation4], 1
    %s792 = scalar_lea.sflag [#allocation4], 1
    %793 = vsyncpa %s792, 1
    %794 = vsyncpa [#allocation5], 1
    %s795 = scalar_lea.sflag [#allocation5], 1
    %796 = vsyncpa %s795, 1

</llo_original>
